<compile_context>
chip_gen: v7x
topology: tpu7x:2x2x1
jax: 0.10.0
libtpu: 0.0.40
codegen_flags: <defaults>
</compile_context>

<pallas_src>
import jax
import jax.numpy as jnp
from jax.experimental import pallas as pl
from jax.experimental.pallas import tpu as pltpu

N_Z = 64  # hard-coded in the PyTorch module: z = x[:, :64, :]


def _conv3_sigmoid(y, w0, w1, w2, bias, c):
    """Conv1d(1,1,k=3, zero pad=1) along the channel (lane) axis + sigmoid.

    y: (R, C) f32.  conv[ch] = w0*y[ch-1] + w1*y[ch] + w2*y[ch+1] + bias
    Rolls go to the XLU; sigmoid goes to the EUP; both are off the VALU path.
    """
    lane = jax.lax.broadcasted_iota(jnp.int32, y.shape, 1)
    y_l = jnp.where(lane == 0, 0.0, pltpu.roll(y, shift=1, axis=1))
    y_r = jnp.where(lane == c - 1, 0.0, pltpu.roll(y, shift=c - 1, axis=1))
    return jax.nn.sigmoid(w0 * y_l + w1 * y + w2 * y_r + bias)


def _eca_kernel(wb_ref, x_ref, o_ref):
    # wb_ref: SMEM (4,) f32  -> [w0, w1, w2, bias] of Conv1d(1, 1, kernel_size=3)
    # x_ref : VMEM (TB, N, C) in the input dtype
    # o_ref : VMEM (TB, N, C) in the input dtype
    tb, n, c = x_ref.shape
    w0 = wb_ref[0]
    w1 = wb_ref[1]
    w2 = wb_ref[2]
    bias = wb_ref[3]

    # Static slices at token 64: sublane-aligned for f32/bf16/int8 -> free views,
    # unmasked loads/stores.
    z_in = x_ref[:, :N_Z, :]          # (TB, 64, C)   native dtype
    x_in = x_ref[:, N_Z:, :]          # (TB, N-64, C) native dtype

    # Per-group channel means (== AdaptiveAvgPool2d(1) on the patch view), in f32.
    y_z = jnp.sum(z_in.astype(jnp.float32), axis=1) * (1.0 / N_Z)        # (TB, C)
    y_x = jnp.sum(x_in.astype(jnp.float32), axis=1) * (1.0 / (n - N_Z))  # (TB, C)

    # Gates (f32 math on tiny (TB, C) arrays), scale applied in the native dtype.
    s_z = _conv3_sigmoid(y_z, w0, w1, w2, bias, c).astype(o_ref.dtype)
    s_x = _conv3_sigmoid(y_x, w0, w1, w2, bias, c).astype(o_ref.dtype)

    # Two unmasked, lane-dense stores (token-64 boundary is sublane aligned).
    o_ref[:, :N_Z, :] = z_in * s_z[:, None, :]
    o_ref[:, N_Z:, :] = x_in * s_x[:, None, :]


def _vmem_capacity_bytes():
    """Per-TensorCore VMEM capacity; conservative (v7x) fallback if unknown."""
    try:
        cap = int(getattr(pltpu.get_tpu_info(), "vmem_capacity_bytes"))
        if cap > 0:
            return cap
    except Exception:
        pass
    return 64 * 2**20


def _pick_tb(batch, n, c, itemsize, block_target_bytes):
    """Batch rows per grid step.

    Targets ~block_target_bytes per block (bigger DMAs, fewer 0.35 us grid steps),
    keeps >= 2 grid steps when possible, and prefers an even step count so the
    'parallel' axis splits evenly across v7x's two TensorCores.
    """
    bytes_per_row = max(1, n * c * itemsize)
    tb = max(1, min(batch, block_target_bytes // bytes_per_row))
    if batch >= 2:
        tb = max(1, min(tb, pl.cdiv(batch, 2)))
    # Best effort: even number of grid steps (v7x 2-TC load balance).
    for cand in range(tb, max(0, tb - 8), -1):
        if pl.cdiv(batch, cand) % 2 == 0:
            return cand
    return tb


@jax.jit
def eca_attention(x, conv_w, conv_b):
    """x: (B, N, C) with N > 64; conv_w: (3,); conv_b: ()."""
    B, N, C = x.shape
    assert N > N_Z, "ECAAttention requires N > 64 tokens (z group is x[:, :64, :])"

    wb = jnp.concatenate([conv_w.astype(jnp.float32).reshape(3),
                          jnp.reshape(conv_b, (1,)).astype(jnp.float32)])

    # Keep output stores lane-dense: pad channels to a multiple of 128.  Zero
    # channels have mean 0, so the zero-padded k=3 conv on real channels is
    # unchanged; padded channels are sliced off at the end.
    Cp = ((C + 127) // 128) * 128
    xp = x if Cp == C else jnp.pad(x, ((0, 0), (0, 0), (0, Cp - C)))

    vmem_cap = _vmem_capacity_bytes()
    # v7x (64 MiB VMEM/TC): ~4 MiB blocks, limit <= 48 MiB.
    # v5e/v6e (128 MiB VMEM): ~8 MiB blocks, limit <= 96 MiB.
    block_target = 4 * 2**20 if vmem_cap <= 64 * 2**20 else 8 * 2**20
    cap_limit = min(vmem_cap * 3 // 4, 96 * 2**20)

    tb = _pick_tb(B, N, Cp, xp.dtype.itemsize, block_target)
    block_bytes = tb * N * Cp * xp.dtype.itemsize
    # double-buffered in/out blocks + in-kernel temporaries, with headroom
    vmem_limit = int(min(cap_limit, max(32 * 2**20, 10 * block_bytes)))

    out = pl.pallas_call(
        _eca_kernel,
        out_shape=jax.ShapeDtypeStruct((B, N, Cp), xp.dtype),
        grid_spec=pltpu.PrefetchScalarGridSpec(
            num_scalar_prefetch=1,                     # wb -> SMEM
            grid=(pl.cdiv(B, tb),),                    # ragged last block is padded/masked
            in_specs=[pl.BlockSpec((tb, N, Cp), lambda b, wb: (b, 0, 0))],
            out_specs=pl.BlockSpec((tb, N, Cp), lambda b, wb: (b, 0, 0)),
        ),
        compiler_params=pltpu.CompilerParams(
            dimension_semantics=("parallel",),
            vmem_limit_bytes=vmem_limit),
    )(wb, xp)

    return out if Cp == C else out[:, :, :C]


def _reference(x, conv_w, conv_b):
    """Pure-JAX reference matching the PyTorch forward exactly."""
    z, xs = x[:, :N_Z, :], x[:, N_Z:, :]

    def scale(tok):
        y = tok.astype(jnp.float32).mean(axis=1)               # (B, C)
        yp = jnp.pad(y, ((0, 0), (1, 1)))
        conv = conv_w[0] * yp[:, :-2] + conv_w[1] * yp[:, 1:-1] \
             + conv_w[2] * yp[:, 2:] + conv_b
        s = jax.nn.sigmoid(conv)
        return (tok.astype(jnp.float32) * s[:, None, :]).astype(x.dtype)

    return jnp.concatenate([scale(z), scale(xs)], axis=1)


if __name__ == "__main__":
    key = jax.random.PRNGKey(0)
    k_x, k_w, k_b = jax.random.split(key, 3)

    B, C = 2, 128
    N_X = 16                 # x-group tokens (4x4 patch); z-group is fixed at 64 (8x8)
    N = N_Z + N_X

    x = jax.random.normal(k_x, (B, N, C), dtype=jnp.float32)
    # Conv1d(1, 1, kernel_size=3) parameters: weight (1,1,3) -> (3,), bias (1,) -> ()
    conv_w = 0.1 * jax.random.normal(k_w, (3,), dtype=jnp.float32)
    conv_b = 0.05 * jax.random.normal(k_b, (), dtype=jnp.float32)

    out = jax.block_until_ready(eca_attention(x, conv_w, conv_b))
    ref = _reference(x, conv_w, conv_b)

    assert out.shape == (B, N, C) and out.dtype == x.dtype
    assert jnp.allclose(out, ref, atol=1e-5, rtol=1e-5)

    print("KERNEL_OK")
</pallas_src>

<mosaic_0001>
module attributes {stable_mosaic.version = 11 : i64} {
  func.func @_eca_kernel(%arg0: i32, %arg1: memref<4xf32, #tpu.memory_space<smem>>, %arg2: memref<1x80x128xf32, #tpu.memory_space<vmem>>, %arg3: memref<1x80x128xf32, #tpu.memory_space<vmem>>) attributes {dimension_semantics = [#tpu.dimension_semantics<parallel>], iteration_bounds = array<i64: 2>, scalar_prefetch = 1 : i64, scratch_operands = 0 : i64, tpu.core_type = #tpu.core_type<tc>, window_params = [{transform_indices = @transform_0, window_bounds = array<i64: 1, 80, 128>}, {transform_indices = @transform_1, window_bounds = array<i64: 1, 80, 128>}]} {
    %c0 = arith.constant 0 : index
    %0 = memref.load %arg1[%c0] : memref<4xf32, #tpu.memory_space<smem>>
    %c1 = arith.constant 1 : index
    %1 = memref.load %arg1[%c1] : memref<4xf32, #tpu.memory_space<smem>>
    %c2 = arith.constant 2 : index
    %2 = memref.load %arg1[%c2] : memref<4xf32, #tpu.memory_space<smem>>
    %c3 = arith.constant 3 : index
    %3 = memref.load %arg1[%c3] : memref<4xf32, #tpu.memory_space<smem>>
    %c0_0 = arith.constant 0 : index
    %c0_1 = arith.constant 0 : index
    %c0_2 = arith.constant 0 : index
    %4 = vector.load %arg2[%c0_0, %c0_1, %c0_2] : memref<1x80x128xf32, #tpu.memory_space<vmem>>, vector<1x64x128xf32>
    %c0_3 = arith.constant 0 : index
    %c64 = arith.constant 64 : index
    %c0_4 = arith.constant 0 : index
    %5 = vector.load %arg2[%c0_3, %c64, %c0_4] : memref<1x80x128xf32, #tpu.memory_space<vmem>>, vector<1x16x128xf32>
    %cst = arith.constant dense<0.000000e+00> : vector<1x128xf32>
    %6 = vector.multi_reduction <add>, %4, %cst [1] : vector<1x64x128xf32> to vector<1x128xf32>
    %cst_5 = arith.constant 1.562500e-02 : f32
    %7 = vector.broadcast %cst_5 : f32 to vector<1x128xf32>
    %8 = arith.mulf %6, %7 : vector<1x128xf32>
    %cst_6 = arith.constant dense<0.000000e+00> : vector<1x128xf32>
    %9 = vector.multi_reduction <add>, %5, %cst_6 [1] : vector<1x16x128xf32> to vector<1x128xf32>
    %cst_7 = arith.constant 6.250000e-02 : f32
    %10 = vector.broadcast %cst_7 : f32 to vector<1x128xf32>
    %11 = arith.mulf %9, %10 : vector<1x128xf32>
    %12 = tpu.iota {dimensions = array<i32: 1>} : vector<1x128xi32>
    %c0_i32 = arith.constant 0 : i32
    %13 = vector.broadcast %c0_i32 : i32 to vector<1x128xi32>
    %14 = arith.cmpi eq, %12, %13 : vector<1x128xi32>
    %c1_i32 = arith.constant 1 : i32
    %15 = tpu.dynamic_rotate %8 by %c1_i32 dim 1 : vector<1x128xf32>, i32 -> vector<1x128xf32>
    %cst_8 = arith.constant 0.000000e+00 : f32
    %16 = vector.broadcast %cst_8 : f32 to vector<1x128xf32>
    %17 = arith.select %14, %16, %15 : vector<1x128xi1>, vector<1x128xf32>
    %c127_i32 = arith.constant 127 : i32
    %18 = vector.broadcast %c127_i32 : i32 to vector<1x128xi32>
    %19 = arith.cmpi eq, %12, %18 : vector<1x128xi32>
    %c127_i32_9 = arith.constant 127 : i32
    %20 = tpu.dynamic_rotate %8 by %c127_i32_9 dim 1 : vector<1x128xf32>, i32 -> vector<1x128xf32>
    %cst_10 = arith.constant 0.000000e+00 : f32
    %21 = vector.broadcast %cst_10 : f32 to vector<1x128xf32>
    %22 = arith.select %19, %21, %20 : vector<1x128xi1>, vector<1x128xf32>
    %23 = vector.broadcast %0 : f32 to vector<1x128xf32>
    %24 = arith.mulf %23, %17 : vector<1x128xf32>
    %25 = vector.broadcast %1 : f32 to vector<1x128xf32>
    %26 = arith.mulf %25, %8 : vector<1x128xf32>
    %27 = arith.addf %24, %26 : vector<1x128xf32>
    %28 = vector.broadcast %2 : f32 to vector<1x128xf32>
    %29 = arith.mulf %28, %22 : vector<1x128xf32>
    %30 = arith.addf %27, %29 : vector<1x128xf32>
    %31 = vector.broadcast %3 : f32 to vector<1x128xf32>
    %32 = arith.addf %30, %31 : vector<1x128xf32>
    %33 = arith.negf %32 : vector<1x128xf32>
    %34 = math.exp %33 : vector<1x128xf32>
    %cst_11 = arith.constant 1.000000e+00 : f32
    %35 = vector.broadcast %cst_11 : f32 to vector<1x128xf32>
    %36 = arith.addf %35, %34 : vector<1x128xf32>
    %37 = arith.divf %35, %36 : vector<1x128xf32>
    %38 = tpu.iota {dimensions = array<i32: 1>} : vector<1x128xi32>
    %c0_i32_12 = arith.constant 0 : i32
    %39 = vector.broadcast %c0_i32_12 : i32 to vector<1x128xi32>
    %40 = arith.cmpi eq, %38, %39 : vector<1x128xi32>
    %c1_i32_13 = arith.constant 1 : i32
    %41 = tpu.dynamic_rotate %11 by %c1_i32_13 dim 1 : vector<1x128xf32>, i32 -> vector<1x128xf32>
    %cst_14 = arith.constant 0.000000e+00 : f32
    %42 = vector.broadcast %cst_14 : f32 to vector<1x128xf32>
    %43 = arith.select %40, %42, %41 : vector<1x128xi1>, vector<1x128xf32>
    %c127_i32_15 = arith.constant 127 : i32
    %44 = vector.broadcast %c127_i32_15 : i32 to vector<1x128xi32>
    %45 = arith.cmpi eq, %38, %44 : vector<1x128xi32>
    %c127_i32_16 = arith.constant 127 : i32
    %46 = tpu.dynamic_rotate %11 by %c127_i32_16 dim 1 : vector<1x128xf32>, i32 -> vector<1x128xf32>
    %cst_17 = arith.constant 0.000000e+00 : f32
    %47 = vector.broadcast %cst_17 : f32 to vector<1x128xf32>
    %48 = arith.select %45, %47, %46 : vector<1x128xi1>, vector<1x128xf32>
    %49 = vector.broadcast %0 : f32 to vector<1x128xf32>
    %50 = arith.mulf %49, %43 : vector<1x128xf32>
    %51 = vector.broadcast %1 : f32 to vector<1x128xf32>
    %52 = arith.mulf %51, %11 : vector<1x128xf32>
    %53 = arith.addf %50, %52 : vector<1x128xf32>
    %54 = vector.broadcast %2 : f32 to vector<1x128xf32>
    %55 = arith.mulf %54, %48 : vector<1x128xf32>
    %56 = arith.addf %53, %55 : vector<1x128xf32>
    %57 = vector.broadcast %3 : f32 to vector<1x128xf32>
    %58 = arith.addf %56, %57 : vector<1x128xf32>
    %59 = arith.negf %58 : vector<1x128xf32>
    %60 = math.exp %59 : vector<1x128xf32>
    %cst_18 = arith.constant 1.000000e+00 : f32
    %61 = vector.broadcast %cst_18 : f32 to vector<1x128xf32>
    %62 = arith.addf %61, %60 : vector<1x128xf32>
    %63 = arith.divf %61, %62 : vector<1x128xf32>
    %64 = vector.shape_cast %37 : vector<1x128xf32> to vector<1x1x128xf32>
    %65 = vector.broadcast %64 : vector<1x1x128xf32> to vector<1x64x128xf32>
    %66 = arith.mulf %4, %65 : vector<1x64x128xf32>
    %c0_19 = arith.constant 0 : index
    %c0_20 = arith.constant 0 : index
    %c0_21 = arith.constant 0 : index
    %67 = vector.load %arg3[%c0_19, %c0_20, %c0_21] : memref<1x80x128xf32, #tpu.memory_space<vmem>>, vector<1x64x128xf32>
    tpu.vector_store %arg3[%c0_19, %c0_20, %c0_21], %66 {strides = array<i32>} : memref<1x80x128xf32, #tpu.memory_space<vmem>>, vector<1x64x128xf32>,
    %68 = vector.shape_cast %63 : vector<1x128xf32> to vector<1x1x128xf32>
    %69 = vector.broadcast %68 : vector<1x1x128xf32> to vector<1x16x128xf32>
    %70 = arith.mulf %5, %69 : vector<1x16x128xf32>
    %c0_22 = arith.constant 0 : index
    %c64_23 = arith.constant 64 : index
    %c0_24 = arith.constant 0 : index
    %71 = vector.load %arg3[%c0_22, %c64_23, %c0_24] : memref<1x80x128xf32, #tpu.memory_space<vmem>>, vector<1x16x128xf32>
    tpu.vector_store %arg3[%c0_22, %c64_23, %c0_24], %70 {strides = array<i32>} : memref<1x80x128xf32, #tpu.memory_space<vmem>>, vector<1x16x128xf32>,
    return
  }
  func.func @transform_0(%arg0: i32, %arg1: memref<4xf32, #tpu.memory_space<smem>>) -> (i32, i32, i32) {
    %c0_i32 = arith.constant 0 : i32
    %c0_i32_0 = arith.constant 0 : i32
    %c0_i32_1 = arith.constant 0 : i32
    return %arg0, %c0_i32, %c0_i32_0 : i32, i32, i32
  }
  func.func @transform_1(%arg0: i32, %arg1: memref<4xf32, #tpu.memory_space<smem>>) -> (i32, i32, i32) {
    %c0_i32 = arith.constant 0 : i32
    %c0_i32_0 = arith.constant 0 : i32
    %c0_i32_1 = arith.constant 0 : i32
    return %arg0, %c0_i32, %c0_i32_0 : i32, i32, i32
  }
}

</mosaic_0001>

<llo_original>
// kernel: eca_attention.1
$region0: #{eca_attention.1}
  #allocation0 [shape = 'u32[]', space=smem, size = 0x4, offset = 0x4, fixed_abs, tag = 'smem constant byte address 0x4 - core index']
  #allocation1 [shape = 'u32[144,128]{1,0:T(1,128)}', space=vmem, size = 0x12000, scoped, tag = 'internal scratch']
  #allocation2 [shape = 's32[1]{0}', space=sflag, size = 0x4, scoped, tag = 'scoped memory for eca_attention.1']
  #allocation3 [shape = 'u8[512]{0}', space=smem, size = 0x200, scoped, tag = 'prefetched SMEM operand 0']
  %s0 = inlined_call_operand.vmem [shape: f32[4], index: 0, kind: input, shape index: {}]
  %s1 = inlined_call_operand.hbm [shape: f32[2,80,128], index: 1, kind: input, shape index: {}]
  %s2 = inlined_call_operand.hbm [shape: f32[2,80,128], index: 2, kind: output, shape index: {}]
  %s3 = sld [smem:[#allocation0]]
  $region41: #{eca_attention.1} parent=0
    _
  %s5 = ssub.s32 1, %s3
  %s6 = scalar_select 0, %s5, %s3
  %s7 = sshll.u32 %s0, 4
  %s8 = int_to_ptr.vmem [resolvable:$true] %s7
  %10 = dma.vmem_to_smem %s8, 16, [#allocation3], [#allocation2]
  %11 = dma.done [#allocation2], 16
  %12 = sfence
  $region1: #{eca_attention.1} parent=0
    #allocation4 [shape = 'u8[81920]{0}', space=vmem, size = 0x14000, scoped, tag = 'input window, operand 1']
    #allocation5 [shape = 's32[2]{0}', space=sflag, size = 0x8, scoped, tag = 'scoped memory for eca_attention.1']
    #allocation6 [shape = 's32[2]{0}', space=sflag, size = 0x8, scoped, tag = 'scoped memory for eca_attention.1']
    #allocation7 [shape = 'u8[81920]{0}', space=vmem, size = 0x14000, scoped, tag = 'output window, operand 0']
    %13 = vsyncpa [#allocation5], 0
    %s14 = scalar_lea.sflag [#allocation5], 1
    %15 = vsyncpa %s14, 0
    %16 = vsyncpa [#allocation6], 0
    %s17 = scalar_lea.sflag [#allocation6], 1
    %18 = vsyncpa %s17, 0
    loop: start=0, step=1, limit=4
    $region2: #{eca_attention.1} parent=1 // loop_pre_header
      _
    $region3: #{eca_attention.1} parent=1 // loop_header
      %s20 = sphi 0, %s24
      %p21 = scmp.ge.s32.totalorder %s20, 4
      %s30 = sphi 0, %s32
      %s33 = sphi 0, %s30
      %s34 = sphi 0, %s33
      %s50 = sphi 0, %s34
      %s56 = sphi 0, %s58
      %s59 = sphi 0, %s56
      %s60 = sphi 0, %s59
      %s76 = sphi 0, %s60
    $region4: #{eca_attention.1} parent=1 // loop_header_branch
      %23 = sbr.rel (%p21) target = $region8
    $region5: #{eca_attention.1} parent=1 // loop_body
      %s25 = ssub.s32 %s20, 1
      %s26 = ssub.s32 %s20, 2
      %s27 = sadd.s32 %s20, 1
      %s28 = ssub.s32 %s20, %s27
      %p29 = scmp.eq.s32.totalorder %s28, 0
      %s31 = sadd.s32 %s30, 1
      %s32 = scalar_select %p29, %s30, %s31
      %p35 = pneg %p29
      %p36 = scmp.eq.s32.totalorder %s20, 1
      %p37 = por %p35, %p36
      %p38 = scmp.ne.s32.totalorder %s30, %s33
      %p39 = scmp.eq.s32.totalorder %s20, 0
      %p40 = por %p38, %p39
      %p41 = scmp.ne.s32.totalorder %s30, %s33
      %p42 = scmp.eq.s32.totalorder %s25, 1
      %p43 = por %p41, %p42
      %p44 = scmp.ne.s32.totalorder %s33, %s34
      %p45 = scmp.eq.s32.totalorder %s25, 0
      %p46 = por %p44, %p45
      %p47 = scmp.ne.s32.totalorder %s33, %s34
      %p48 = scmp.eq.s32.totalorder %s26, 1
      %p49 = por %p47, %p48
      %p51 = scmp.ne.s32.totalorder %s34, %s50
      %p52 = scmp.eq.s32.totalorder %s26, 0
      %p53 = por %p51, %p52
      %s54 = ssub.s32 %s20, %s27
      %p55 = scmp.eq.s32.totalorder %s54, 0
      %s57 = sadd.s32 %s56, 1
      %s58 = scalar_select %p55, %s56, %s57
      %p61 = pneg %p55
      %p62 = scmp.eq.s32.totalorder %s20, 1
      %p63 = por %p61, %p62
      %p64 = scmp.ne.s32.totalorder %s56, %s59
      %p65 = scmp.eq.s32.totalorder %s20, 0
      %p66 = por %p64, %p65
      %p67 = scmp.ne.s32.totalorder %s56, %s59
      %p68 = scmp.eq.s32.totalorder %s25, 1
      %p69 = por %p67, %p68
      %p70 = scmp.ne.s32.totalorder %s59, %s60
      %p71 = scmp.eq.s32.totalorder %s25, 0
      %p72 = por %p70, %p71
      %p73 = scmp.ne.s32.totalorder %s59, %s60
      %p74 = scmp.eq.s32.totalorder %s26, 1
      %p75 = por %p73, %p74
      %p77 = scmp.ne.s32.totalorder %s60, %s76
      %p78 = scmp.eq.s32.totalorder %s26, 0
      %p79 = por %p77, %p78
      %p80 = scmp.le.s32.totalorder 1, %s20
      %p81 = scmp.lt.s32.totalorder %s20, 3
      %p82 = pnand %p80, %p81
      %p83 = pneg %p82
      // Predicated region
      $region9: #{eca_attention.1} parent=5 // pred_check
        _
      $region10: #{eca_attention.1} parent=5 // pred_check_branch
        %85 = sbr.rel (%p82) target = $region12
      $region11: #{eca_attention.1} parent=5 // pred_region
        %s86 = ssub.s32 %s20, 1
      $region12: #{eca_attention.1} parent=5 // pred_fallthru
        _
      %p87 = scmp.lt.s32.totalorder %s20, 2
      // Predicated region
      $region13: #{eca_attention.1} parent=5 // pred_check
        %p88 = pneg %p87
      $region14: #{eca_attention.1} parent=5 // pred_check_branch
        %90 = sbr.rel (%p88) target = $region16
      $region15: #{eca_attention.1} parent=5 // pred_region
        // Predicated region
        $region17: #{eca_attention.1} parent=15 // pred_check
          %p91 = pneg %p40
        $region18: #{eca_attention.1} parent=15 // pred_check_branch
          %93 = sbr.rel (%p91) target = $region20
        $region19: #{eca_attention.1} parent=15 // pred_region
          %s94 = sand.u32 %s30, 1
          %s95 = scalar_lea.sflag [#allocation5], %s94
          %s96 = sand.u32 %s30, 1
          %s97 = smul.addr %s96, 80
          %s98 = scalar_lea.vmem [#allocation4], %s97
          %s100 = ssub.s32 1280, 1280
          %101 = vsyncadd %s95, %s100
          %s102 = smul.addr %s20, 10
          %s103 = smul.addr %s102, 128
          %s104 = scalar_lea.hbm %s1, %s103
          %s105 = sshll.u32 %s98, 4
          %s106 = int_to_ptr.vmem [resolvable:$true] %s105
          %111 = dma.hbm_to_vmem [thread:$0]  %s104, 1280, %s106, %s95, 128, 128, 8
        $region20: #{eca_attention.1} parent=15 // pred_fallthru
          _
      $region16: #{eca_attention.1} parent=5 // pred_fallthru
        _
      %p112 = scmp.le.s32.totalorder 1, %s20
      %p113 = scmp.lt.s32.totalorder %s20, 3
      %p114 = pnand %p112, %p113
      %p115 = pneg %p114
      // Predicated region
      $region21: #{eca_attention.1} parent=5 // pred_check
        _
      $region22: #{eca_attention.1} parent=5 // pred_check_branch
        %117 = sbr.rel (%p114) target = $region24
      $region23: #{eca_attention.1} parent=5 // pred_region
        %s118 = ssub.s32 %s20, 1
        %s119 = sand.u32 %s33, 1
        %s120 = scalar_lea.sflag [#allocation5], %s119
        %s121 = sand.u32 %s33, 1
        %s122 = smul.addr %s121, 80
        %s123 = scalar_lea.vmem [#allocation4], %s122
        // Predicated region
        $region25: #{eca_attention.1} parent=23 // pred_check
          %p124 = pneg %p46
        $region26: #{eca_attention.1} parent=23 // pred_check_branch
          %126 = sbr.rel (%p124) target = $region28
        $region27: #{eca_attention.1} parent=23 // pred_region
          %127 = dma.done %s120, 1280
        $region28: #{eca_attention.1} parent=23 // pred_fallthru
          _
        %s128 = sand.u32 %s33, 1
        %s129 = scalar_lea.sflag [#allocation5], %s128
        %s130 = sand.u32 %s33, 1
        %s131 = smul.addr %s130, 80
        %s132 = scalar_lea.vmem [#allocation4], %s131
        %p133 = pneg %p46
        %p134 = pneg %p43
        %p135 = pneg %p72
        %p136 = pneg %p69
        %s137 = sand.u32 %s59, 1
        %s138 = scalar_lea.sflag [#allocation6], %s137
        %s139 = sand.u32 %s59, 1
        %s140 = smul.addr %s139, 80
        %s141 = scalar_lea.vmem [#allocation7], %s140
        %s142 = sld [smem:[#allocation3]]
        %s143 = sld [smem:[#allocation3 + $0x1]]
        %s144 = sld [smem:[#allocation3 + $0x2]]
        %s145 = sld [smem:[#allocation3 + $0x3]]
        %v146 = vld [vmem:[%s123] sm:$0xff]
        %v147 = vld [vmem:[%s123 + $0x8] sm:$0xff]
        %v148 = vld [vmem:[%s123 + $0x10] sm:$0xff]
        %v149 = vld [vmem:[%s123 + $0x18] sm:$0xff]
        %v150 = vld [vmem:[%s123 + $0x20] sm:$0xff]
        %v151 = vld [vmem:[%s123 + $0x28] sm:$0xff]
        %v152 = vld [vmem:[%s123 + $0x30] sm:$0xff]
        %v153 = vld [vmem:[%s123 + $0x38] sm:$0xff]
        %v154 = vld [vmem:[%s123 + $0x40] sm:$0xff]
        %v155 = vld [vmem:[%s123 + $0x48] sm:$0xff]
        %v156 = vadd.f32 %v146, %v147
        %v157 = vadd.f32 %v156, %v148
        %v158 = vadd.f32 %v157, %v149
        %v159 = vadd.f32 %v158, %v150
        %v160 = vadd.f32 %v159, %v151
        %v161 = vadd.f32 %v160, %v152
        %v162 = vadd.f32 %v161, %v153
        %v163 = vrot.slane %v162, 4
        %v164 = vadd.f32 %v162, %v163
        %v165 = vrot.slane %v164, 2
        %v166 = vadd.f32 %v164, %v165
        %v167 = vrot.slane %v166, 1
        %v168 = vadd.f32 %v166, %v167
        %v169 = vmul.f32 %v168, 0.015625
        %v170 = vadd.f32 %v154, %v155
        %v171 = vrot.slane %v170, 4
        %v172 = vadd.f32 %v170, %v171
        %v173 = vrot.slane %v172, 2
        %v174 = vadd.f32 %v172, %v173
        %v175 = vrot.slane %v174, 1
        %v176 = vadd.f32 %v174, %v175
        %v177 = vmul.f32 %v176, 0.0625
        %v178 = vlaneseq
        %v179 = vand.u32 %v178, 127
        %vm180 = vcmp.eq.s32.totalorder %v179, 0
        %181 = vrot.lane.b32.xlu0 %v169, 1
        %v182 = vpop.permute.xlu0 %181
        %v183 = vsel %vm180, 0.0, %v182
        %vm184 = vcmp.eq.s32.totalorder %v179, 127
        %185 = vrot.lane.b32.xlu0 %v169, 127
        %v186 = vpop.permute.xlu0 %185
        %v187 = vsel %vm184, 0.0, %v186
        %v188 = vstv %s142
        %v189 = vmul.f32 %v188, %v183
        %v190 = vstv %s143
        %v191 = vmul.f32 %v190, %v169
        %v192 = vadd.f32 %v189, %v191
        %v193 = vstv %s144
        %v194 = vmul.f32 %v193, %v187
        %v195 = vadd.f32 %v192, %v194
        %v196 = vstv %s145
        %v197 = vadd.f32 %v195, %v196
        %v198 = vxor.u32 %v197, 2147483648
        %v199 = vmul.f32 %v198, 1.442695
        %v200 = vpow.pop %v199
        %v201 = vadd.f32 %v200, 1.0
        %v202 = vrcp.pop %v201
        %v203 = vmul.f32 1.0, %v202
        %204 = vrot.lane.b32.xlu0 %v177, 1
        %v205 = vpop.permute.xlu0 %204
        %v206 = vsel %vm180, 0.0, %v205
        %207 = vrot.lane.b32.xlu0 %v177, 127
        %v208 = vpop.permute.xlu0 %207
        %v209 = vsel %vm184, 0.0, %v208
        %v210 = vmul.f32 %v188, %v206
        %v211 = vmul.f32 %v190, %v177
        %v212 = vadd.f32 %v210, %v211
        %v213 = vmul.f32 %v193, %v209
        %v214 = vadd.f32 %v212, %v213
        %v215 = vadd.f32 %v214, %v196
        %v216 = vxor.u32 %v215, 2147483648
        %v217 = vmul.f32 %v216, 1.442695
        %v218 = vpow.pop %v217
        %v219 = vadd.f32 %v218, 1.0
        %v220 = vrcp.pop %v219
        %v221 = vmul.f32 1.0, %v220
        %v222 = vlaneseq
        %v223 = vshrl.u32 %v222, 7
        %v224 = vsub.s32 0, %v223
        %v225 = vrot.slane %v203, %v224
        %v226 = vmul.f32 %v146, %v225
        %v227 = vmul.f32 %v147, %v225
        %v228 = vmul.f32 %v148, %v225
        %v229 = vmul.f32 %v149, %v225
        %v230 = vmul.f32 %v150, %v225
        %v231 = vmul.f32 %v151, %v225
        %v232 = vmul.f32 %v152, %v225
        %v233 = vmul.f32 %v153, %v225
        %234 = vst [vmem:[%s141] sm:$0xff] %v226
        %235 = vst [vmem:[%s141 + $0x8] sm:$0xff] %v227
        %236 = vst [vmem:[%s141 + $0x10] sm:$0xff] %v228
        %237 = vst [vmem:[%s141 + $0x18] sm:$0xff] %v229
        %238 = vst [vmem:[%s141 + $0x20] sm:$0xff] %v230
        %239 = vst [vmem:[%s141 + $0x28] sm:$0xff] %v231
        %240 = vst [vmem:[%s141 + $0x30] sm:$0xff] %v232
        %241 = vst [vmem:[%s141 + $0x38] sm:$0xff] %v233
        %v242 = vlaneseq
        %v243 = vshrl.u32 %v242, 7
        %v244 = vsub.s32 0, %v243
        %v245 = vrot.slane %v221, %v244
        %v246 = vmul.f32 %v154, %v245
        %v247 = vmul.f32 %v155, %v245
        %248 = vst [vmem:[%s141 + $0x40] sm:$0xff] %v246
        %249 = vst [vmem:[%s141 + $0x48] sm:$0xff] %v247
        %s250 = sand.u32 %s59, 1
        %s251 = scalar_lea.sflag [#allocation6], %s250
        %s252 = sand.u32 %s59, 1
        %s253 = smul.addr %s252, 80
        %s254 = scalar_lea.vmem [#allocation7], %s253
        // Predicated region
        $region29: #{eca_attention.1} parent=23 // pred_check
          %p255 = pneg %p69
        $region30: #{eca_attention.1} parent=23 // pred_check_branch
          %257 = sbr.rel (%p255) target = $region32
        $region31: #{eca_attention.1} parent=23 // pred_region
          %s259 = ssub.s32 1280, 1280
          %260 = vsyncadd %s251, %s259
          %s261 = smul.addr %s25, 10
          %s262 = smul.addr %s261, 128
          %s263 = scalar_lea.hbm %s2, %s262
          %s264 = sshll.u32 %s254, 4
          %s265 = int_to_ptr.vmem [resolvable:$true] %s264
          %270 = dma.vmem_to_hbm [thread:$0]  %s265, 1280, %s263, %s251, 128, 128, 8
        $region32: #{eca_attention.1} parent=23 // pred_fallthru
          _
      $region24: #{eca_attention.1} parent=5 // pred_fallthru
        _
      %p271 = scmp.le.s32.totalorder 2, %s20
      // Predicated region
      $region33: #{eca_attention.1} parent=5 // pred_check
        %p272 = pneg %p271
      $region34: #{eca_attention.1} parent=5 // pred_check_branch
        %274 = sbr.rel (%p272) target = $region36
      $region35: #{eca_attention.1} parent=5 // pred_region
        %s275 = ssub.s32 %s20, 2
        // Predicated region
        $region37: #{eca_attention.1} parent=35 // pred_check
          %p276 = pneg %p75
        $region38: #{eca_attention.1} parent=35 // pred_check_branch
          %278 = sbr.rel (%p276) target = $region40
        $region39: #{eca_attention.1} parent=35 // pred_region
          %s279 = sand.u32 %s60, 1
          %s280 = scalar_lea.sflag [#allocation6], %s279
          %s281 = sand.u32 %s60, 1
          %s282 = smul.addr %s281, 80
          %s283 = scalar_lea.vmem [#allocation7], %s282
          %284 = dma.done %s280, 1280
        $region40: #{eca_attention.1} parent=35 // pred_fallthru
          _
      $region36: #{eca_attention.1} parent=5 // pred_fallthru
        _
    $region6: #{eca_attention.1} parent=1 // loop_footer
      %s24 = sadd.s32 1, %s20
    $region7: #{eca_attention.1} parent=1 // loop_footer_branch
      %19 = sbr.rel target = $region3
    $region8: #{eca_attention.1} parent=1 // loop_exit
      _
    %285 = vsyncpa [#allocation5], 1
    %s286 = scalar_lea.sflag [#allocation5], 1
    %287 = vsyncpa %s286, 1
    %288 = vsyncpa [#allocation6], 1
    %s289 = scalar_lea.sflag [#allocation6], 1
    %290 = vsyncpa %s289, 1

</llo_original>
